<compile_context>
chip_gen: v6e
topology: v6e:2x2x1
jax: 0.10.0
libtpu: 0.0.40
codegen_flags: <defaults>
</compile_context>

<pallas_src>
import jax
import jax.numpy as jnp
from jax.experimental import pallas as pl
from jax.experimental.pallas import tpu as pltpu

LANE = 128   # hidden dim (30) is zero-padded to a full 128-lane slab
OUT_PAD = 8  # nb_action (4) is zero-padded to 8 lanes for the second matmul


def _round_up(x, m):
    return ((x + m - 1) // m) * m


def _mlp_kernel(x_ref, p_ref, w2_ref, o_ref):
    """q = relu(x @ W1 + b1) @ W2 + b2, all lane-padded compute, narrow store.

    x_ref : (tb, in_size)            activations tile
    p_ref : (in_size + 2, LANE)      rows [0:in_size]=W1, [in_size]=b1, [in_size+1]=b2
    w2_ref: (LANE, OUT_PAD)          W2 (hidden rows beyond 30 are zero)
    o_ref : (tb, nb_action)          real Q-values only (no lane padding in HBM)
    """
    in_size = x_ref.shape[-1]
    nb_action = o_ref.shape[-1]

    x = x_ref[...]                                                     # (tb, In) f32
    w1 = p_ref[0:in_size, :]                                           # (In, 128)
    b1 = p_ref[in_size:in_size + 1, :]                                 # (1, 128)
    b2 = p_ref[in_size + 1:in_size + 2, 0:w2_ref.shape[-1]]            # (1, 8)

    h = jnp.dot(x, w1, preferred_element_type=jnp.float32)             # (tb, 128) MXU
    h = jnp.maximum(h + b1, 0.0)                                       # bias + ReLU (VPU, f32)
    q = jnp.dot(h, w2_ref[...], preferred_element_type=jnp.float32)    # (tb, 8)   MXU
    o_ref[...] = (q + b2)[:, :nb_action].astype(o_ref.dtype)           # narrow store


def _pack_params(w1, b1, w2, b2):
    """Pack params into two small lane-aligned slabs (done once per param update).

    Returns:
      p   : (in_size + 2, 128)  -> W1 (zero-padded hidden), b1, b2
      w2p : (128, OUT_PAD)      -> W2 (zero-padded rows/cols)
    Zero padding is mathematically inert: relu(0 + 0) = 0 and padded W2
    rows/cols are zero; padded action columns are never stored.
    """
    in_size, hidden = w1.shape
    nb_action = w2.shape[1]
    assert hidden <= LANE and nb_action <= OUT_PAD <= LANE
    p = (jnp.zeros((in_size + 2, LANE), jnp.float32)
         .at[:in_size, :hidden].set(w1)
         .at[in_size, :hidden].set(b1)
         .at[in_size + 1, :nb_action].set(b2))
    w2p = jnp.zeros((LANE, OUT_PAD), jnp.float32).at[:hidden, :nb_action].set(w2)
    return p, w2p


def network_forward(state, w1, b1, w2, b2, *, block_b=2048, small_batch_cutoff=256):
    """Pallas equivalent of Network.forward.

    state: (B, input_size) float32
    w1: (input_size, 30), b1: (30,), w2: (30, nb_action), b2: (nb_action,)
    returns q_values: (B, nb_action) float32
    """
    B, in_size = state.shape
    nb_action = w2.shape[1]
    p, w2p = _pack_params(w1, b1, w2, b2)
    out_shape = jax.ShapeDtypeStruct((B, nb_action), jnp.float32)

    if B <= small_batch_cutoff:
        # Act-selection path: single ungridded call, whole problem in VMEM,
        # 3 operand DMAs, exact-width output (no padded slab to slice later).
        return pl.pallas_call(
            _mlp_kernel,
            out_shape=out_shape,
            in_specs=[pl.BlockSpec(memory_space=pltpu.MemorySpace.VMEM)] * 3,
            out_specs=pl.BlockSpec(memory_space=pltpu.MemorySpace.VMEM),
        )(state, p, w2p)

    # Replay-batch path: tile ONLY over batch; params stay resident.
    # Always produce >= 2 blocks so megacore ("parallel") can use both TCs on v7x.
    blk = min(_round_up(block_b, 8), _round_up(pl.cdiv(B, 2), 8))
    grid = (pl.cdiv(B, blk),)   # partial final block handled by Pallas (no jnp.pad)
    return pl.pallas_call(
        _mlp_kernel,
        out_shape=out_shape,
        grid=grid,
        in_specs=[
            pl.BlockSpec((blk, in_size), lambda i: (i, 0)),   # stream activations
            pl.BlockSpec(p.shape, lambda i: (0, 0)),          # W1/b1/b2 slab resident
            pl.BlockSpec(w2p.shape, lambda i: (0, 0)),        # W2 resident
        ],
        out_specs=pl.BlockSpec((blk, nb_action), lambda i: (i, 0)),
        compiler_params=pltpu.CompilerParams(
            dimension_semantics=("parallel",)),                # shard batch across TCs
    )(state, p, w2p)


def init_params(key, input_size, nb_action, hidden=30):
    """Deterministic init matching nn.Linear defaults (U[-1/sqrt(fan_in), +1/sqrt(fan_in)])."""
    k1, k2, k3, k4 = jax.random.split(key, 4)
    bound1 = 1.0 / jnp.sqrt(float(input_size))
    bound2 = 1.0 / jnp.sqrt(float(hidden))
    w1 = jax.random.uniform(k1, (input_size, hidden), jnp.float32, -bound1, bound1)
    b1 = jax.random.uniform(k2, (hidden,), jnp.float32, -bound1, bound1)
    w2 = jax.random.uniform(k3, (hidden, nb_action), jnp.float32, -bound2, bound2)
    b2 = jax.random.uniform(k4, (nb_action,), jnp.float32, -bound2, bound2)
    return w1, b1, w2, b2


def _ref_forward(state, w1, b1, w2, b2):
    return jnp.maximum(state @ w1 + b1, 0.0) @ w2 + b2


if __name__ == "__main__":
    # FrozenLake-style sizes: 16 state features, 4 actions.
    input_size, nb_action = 16, 4

    key = jax.random.PRNGKey(0)
    kx, kp = jax.random.split(key)
    w1, b1, w2, b2 = init_params(kp, input_size, nb_action)

    # 1) Tiny act-selection batch -> ungridded VMEM-resident path.
    batch = 8
    state = jax.random.normal(kx, (batch, input_size), dtype=jnp.float32)
    q = jax.block_until_ready(network_forward(state, w1, b1, w2, b2))
    ref = _ref_forward(state, w1, b1, w2, b2)
    assert q.shape == (batch, nb_action)
    assert jnp.allclose(q, ref, atol=1e-5, rtol=1e-5)

    # 2) Replay batch (non-multiple size) -> gridded path with >=2 parallel
    #    batch blocks and a clipped partial final block (no wrapper pad/slice).
    big = 300
    state_big = jax.random.normal(kx, (big, input_size), dtype=jnp.float32)
    q_big = jax.block_until_ready(network_forward(state_big, w1, b1, w2, b2))
    ref_big = _ref_forward(state_big, w1, b1, w2, b2)
    assert q_big.shape == (big, nb_action)
    assert jnp.allclose(q_big, ref_big, atol=1e-5, rtol=1e-5)

    print("KERNEL_OK")
</pallas_src>

<mosaic_0001>
module attributes {stable_mosaic.version = 11 : i64} {
  func.func @_mlp_kernel(%arg0: memref<8x16xf32, #tpu.memory_space<vmem>>, %arg1: memref<18x128xf32, #tpu.memory_space<vmem>>, %arg2: memref<128x8xf32, #tpu.memory_space<vmem>>, %arg3: memref<8x4xf32, #tpu.memory_space<vmem>>) attributes {dimension_semantics = [], scalar_prefetch = 0 : i64, scratch_operands = 0 : i64, tpu.core_type = #tpu.core_type<tc>} {
    %c0 = arith.constant 0 : index
    %c0_0 = arith.constant 0 : index
    %0 = vector.load %arg0[%c0, %c0_0] : memref<8x16xf32, #tpu.memory_space<vmem>>, vector<8x16xf32>
    %c0_1 = arith.constant 0 : index
    %c0_2 = arith.constant 0 : index
    %1 = vector.load %arg1[%c0_1, %c0_2] : memref<18x128xf32, #tpu.memory_space<vmem>>, vector<16x128xf32>
    %c16 = arith.constant 16 : index
    %c0_3 = arith.constant 0 : index
    %2 = vector.load %arg1[%c16, %c0_3] : memref<18x128xf32, #tpu.memory_space<vmem>>, vector<1x128xf32>
    %c17 = arith.constant 17 : index
    %c0_4 = arith.constant 0 : index
    %3 = vector.load %arg1[%c17, %c0_4] : memref<18x128xf32, #tpu.memory_space<vmem>>, vector<1x8xf32>
    %cst = arith.constant dense<0.000000e+00> : vector<8x128xf32>
    %4 = tpu.matmul %0, %1, %cst {dimension_numbers = #tpu.dot_dimension_numbers<[1], [0], [0], [1], [0, 0, 1, 1], [], []>} : vector<8x16xf32>, vector<16x128xf32>, vector<8x128xf32> -> vector<8x128xf32>
    %5 = vector.broadcast %2 : vector<1x128xf32> to vector<8x128xf32>
    %6 = arith.addf %4, %5 : vector<8x128xf32>
    %cst_5 = arith.constant 0.000000e+00 : f32
    %7 = vector.broadcast %cst_5 : f32 to vector<8x128xf32>
    %8 = arith.maximumf %6, %7 : vector<8x128xf32>
    %c0_6 = arith.constant 0 : index
    %c0_7 = arith.constant 0 : index
    %9 = vector.load %arg2[%c0_6, %c0_7] : memref<128x8xf32, #tpu.memory_space<vmem>>, vector<128x8xf32>
    %cst_8 = arith.constant dense<0.000000e+00> : vector<8x8xf32>
    %10 = tpu.matmul %8, %9, %cst_8 {dimension_numbers = #tpu.dot_dimension_numbers<[1], [0], [0], [1], [0, 0, 1, 1], [], []>} : vector<8x128xf32>, vector<128x8xf32>, vector<8x8xf32> -> vector<8x8xf32>
    %11 = vector.broadcast %3 : vector<1x8xf32> to vector<8x8xf32>
    %12 = arith.addf %10, %11 : vector<8x8xf32>
    %13 = vector.extract_strided_slice %12 {offsets = [0, 0], sizes = [8, 4], strides = [1, 1]} : vector<8x8xf32> to vector<8x4xf32>
    %c0_9 = arith.constant 0 : index
    %c0_10 = arith.constant 0 : index
    %14 = vector.load %arg3[%c0_9, %c0_10] : memref<8x4xf32, #tpu.memory_space<vmem>>, vector<8x4xf32>
    tpu.vector_store %arg3[%c0_9, %c0_10], %13 {strides = array<i32>} : memref<8x4xf32, #tpu.memory_space<vmem>>, vector<8x4xf32>,
    return
  }
}

</mosaic_0001>

<llo_original>
// kernel: tpu_custom_call.1
$region0: #{tpu_custom_call.1}
  #allocation0 [shape = 'u32[]', space=smem, size = 0x4, offset = 0x4, fixed_abs, tag = 'smem constant byte address 0x4 - core index']
  #allocation1 [shape = 'u32[144,128]{1,0:T(1,128)}', space=vmem, size = 0x12000, scoped, tag = 'internal scratch']
  %s0 = inlined_call_operand.vmem [shape: f32[8,16], index: 0, kind: input, shape index: {}]
  %s1 = inlined_call_operand.vmem [shape: f32[18,128], index: 1, kind: input, shape index: {}]
  %s2 = inlined_call_operand.vmem [shape: f32[128,8], index: 2, kind: input, shape index: {}]
  %s3 = inlined_call_operand.vmem [shape: f32[8,4], index: 3, kind: output, shape index: {}]
  %s4 = sld [smem:[#allocation0]]
  $region22: #{tpu_custom_call.1} parent=0
    _
  %s6 = ssub.s32 1, %s4
  %s7 = scalar_select 0, %s6, %s4
  // Predicated region
  $region2: #{tpu_custom_call.1} parent=0 // pred_check
    _
  $region3: #{tpu_custom_call.1} parent=0 // pred_check_branch
    %9 = sbr.rel (0) target = $region5
  $region4: #{tpu_custom_call.1} parent=0 // pred_region
    _
  $region5: #{tpu_custom_call.1} parent=0 // pred_fallthru
    _
  // Predicated region
  $region6: #{tpu_custom_call.1} parent=0 // pred_check
    _
  $region7: #{tpu_custom_call.1} parent=0 // pred_check_branch
    %11 = sbr.rel (0) target = $region9
  $region8: #{tpu_custom_call.1} parent=0 // pred_region
    _
  $region9: #{tpu_custom_call.1} parent=0 // pred_fallthru
    _
  // Predicated region
  $region10: #{tpu_custom_call.1} parent=0 // pred_check
    _
  $region11: #{tpu_custom_call.1} parent=0 // pred_check_branch
    %13 = sbr.rel (0) target = $region13
  $region12: #{tpu_custom_call.1} parent=0 // pred_region
    _
  $region13: #{tpu_custom_call.1} parent=0 // pred_fallthru
    _
  %v14 = vld [vmem:[%s0] sm:$0xff]
  %v15 = vld [vmem:[%s1] sm:$0xff]
  %v16 = vld [vmem:[%s1 + $0x8] sm:$0xff]
  %v17 = vld [vmem:[%s1 + $0x10] sm:$0x1]
  %v18 = vld [vmem:[%s1 + $0x11] sm:$0x1]
  %v19 = vlaneseq
  %v20 = vshrl.u32 %v19, 7
  %v21 = vsub.s32 0, %v20
  %v22 = vrot.slane %v17, %v21
  %vm23 = vcmask 130048
  %v25 = vsel %vm23, %v14, 0
  %27 = vmatprep.subr.mxu0 0.0
  %28 = vmatpush1.msra.mxu0 0.0
  %29 = vmatprep.subr.mxu0 0.0
  %30 = vmatpush1.msra.mxu0 0.0
  %31 = vmatprep.subr.mxu0 0.0
  %32 = vmatpush1.msra.mxu0 0.0
  %33 = vmatprep.subr.mxu0 0.0
  %34 = vmatpush1.msra.mxu0 0.0
  %35 = vmatprep.subr.mxu0 0.0
  %36 = vmatpush1.msra.mxu0 0.0
  %37 = vmatprep.subr.mxu0 0.0
  %38 = vmatpush1.msra.mxu0 0.0
  %39 = vmatprep.subr.mxu0 0.0
  %40 = vmatpush1.msra.mxu0 0.0
  %41 = vmatprep.subr.mxu0 0.0
  %42 = vmatpush1.msra.mxu0 0.0
  %43 = vmatprep.subr.mxu0 0.0
  %44 = vmatpush1.msra.mxu0 0.0
  %45 = vmatprep.subr.mxu0 0.0
  %46 = vmatpush1.msra.mxu0 0.0
  %47 = vmatprep.subr.mxu0 0.0
  %48 = vmatpush1.msra.mxu0 0.0
  %49 = vmatprep.subr.mxu0 0.0
  %50 = vmatpush1.msra.mxu0 0.0
  %51 = vmatprep.subr.mxu0 0.0
  %52 = vmatpush1.msra.mxu0 0.0
  %53 = vmatprep.subr.mxu0 0.0
  %54 = vmatpush1.msra.mxu0 0.0
  %55 = vmatprep.subr.mxu0 0.0
  %56 = vmatpush1.msra.mxu0 %v16
  %57 = vmatprep.subr.mxu0 0.0
  %58 = vmatpush1.msra.mxu0 %v15
  %59 = vmatprep.subr.mxu0 0.0
  %60 = vmatpush2.msra.mxu0 0.0
  %61 = vmatprep.subr.mxu0 0.0
  %62 = vmatpush2.msra.mxu0 0.0
  %63 = vmatprep.subr.mxu0 0.0
  %64 = vmatpush2.msra.mxu0 0.0
  %65 = vmatprep.subr.mxu0 0.0
  %66 = vmatpush2.msra.mxu0 0.0
  %67 = vmatprep.subr.mxu0 0.0
  %68 = vmatpush2.msra.mxu0 0.0
  %69 = vmatprep.subr.mxu0 0.0
  %70 = vmatpush2.msra.mxu0 0.0
  %71 = vmatprep.subr.mxu0 0.0
  %72 = vmatpush2.msra.mxu0 0.0
  %73 = vmatprep.subr.mxu0 0.0
  %74 = vmatpush2.msra.mxu0 0.0
  %75 = vmatprep.subr.mxu0 0.0
  %76 = vmatpush2.msra.mxu0 0.0
  %77 = vmatprep.subr.mxu0 0.0
  %78 = vmatpush2.msra.mxu0 0.0
  %79 = vmatprep.subr.mxu0 0.0
  %80 = vmatpush2.msra.mxu0 0.0
  %81 = vmatprep.subr.mxu0 0.0
  %82 = vmatpush2.msra.mxu0 0.0
  %83 = vmatprep.subr.mxu0 0.0
  %84 = vmatpush2.msra.mxu0 0.0
  %85 = vmatprep.subr.mxu0 0.0
  %86 = vmatpush2.msra.mxu0 0.0
  %87 = vmatprep.subr.mxu0 0.0
  %88 = vmatpush2.msra.mxu0 0.0
  %89 = vmatprep.subr.mxu0 0.0
  %90 = vmatpush2.msra.mxu0 0.0
  %91 = vmatprep.mubr.f32.mxu0 0.0
  %92 = vmatmul.mubr.f32.gmra.mxu0 %v25
  %v93 = vpop.f32.mrf.mxu0
  %v94 = vadd.f32 %v22, %v93
  %v95 = vpop.f32.mrf.mxu0
  %96 = vdwg.mxu0
  %v97 = vmax.f32 %v94, 0.0
  %v98 = vld [vmem:[%s2] sm:$0xff]
  %v99 = vld [vmem:[%s2 + $0x8] sm:$0xff]
  %v100 = vld [vmem:[%s2 + $0x10] sm:$0xff]
  %v101 = vld [vmem:[%s2 + $0x18] sm:$0xff]
  %v102 = vld [vmem:[%s2 + $0x20] sm:$0xff]
  %v103 = vld [vmem:[%s2 + $0x28] sm:$0xff]
  %v104 = vld [vmem:[%s2 + $0x30] sm:$0xff]
  %v105 = vld [vmem:[%s2 + $0x38] sm:$0xff]
  %v106 = vld [vmem:[%s2 + $0x40] sm:$0xff]
  %v107 = vld [vmem:[%s2 + $0x48] sm:$0xff]
  %v108 = vld [vmem:[%s2 + $0x50] sm:$0xff]
  %v109 = vld [vmem:[%s2 + $0x58] sm:$0xff]
  %v110 = vld [vmem:[%s2 + $0x60] sm:$0xff]
  %v111 = vld [vmem:[%s2 + $0x68] sm:$0xff]
  %v112 = vld [vmem:[%s2 + $0x70] sm:$0xff]
  %v113 = vld [vmem:[%s2 + $0x78] sm:$0xff]
  %v114 = vlaneseq
  %v115 = vshrl.u32 %v114, 7
  %v116 = vsub.s32 0, %v115
  %v117 = vrot.slane %v18, %v116
  %118 = vmatprep.subr.mxu0 0.0
  %119 = vmatpush1.msra.mxu0 %v113
  %120 = vmatprep.subr.mxu0 0.0
  %121 = vmatpush1.msra.mxu0 %v112
  %122 = vmatprep.subr.mxu0 0.0
  %123 = vmatpush1.msra.mxu0 %v111
  %124 = vmatprep.subr.mxu0 0.0
  %125 = vmatpush1.msra.mxu0 %v110
  %126 = vmatprep.subr.mxu0 0.0
  %127 = vmatpush1.msra.mxu0 %v109
  %128 = vmatprep.subr.mxu0 0.0
  %129 = vmatpush1.msra.mxu0 %v108
  %130 = vmatprep.subr.mxu0 0.0
  %131 = vmatpush1.msra.mxu0 %v107
  %132 = vmatprep.subr.mxu0 0.0
  %133 = vmatpush1.msra.mxu0 %v106
  %134 = vmatprep.subr.mxu0 0.0
  %135 = vmatpush1.msra.mxu0 %v105
  %136 = vmatprep.subr.mxu0 0.0
  %137 = vmatpush1.msra.mxu0 %v104
  %138 = vmatprep.subr.mxu0 0.0
  %139 = vmatpush1.msra.mxu0 %v103
  %140 = vmatprep.subr.mxu0 0.0
  %141 = vmatpush1.msra.mxu0 %v102
  %142 = vmatprep.subr.mxu0 0.0
  %143 = vmatpush1.msra.mxu0 %v101
  %144 = vmatprep.subr.mxu0 0.0
  %145 = vmatpush1.msra.mxu0 %v100
  %146 = vmatprep.subr.mxu0 0.0
  %147 = vmatpush1.msra.mxu0 %v99
  %148 = vmatprep.subr.mxu0 0.0
  %149 = vmatpush1.msra.mxu0 %v98
  %150 = vmatprep.subr.mxu0 0.0
  %151 = vmatpush2.msra.mxu0 0.0
  %152 = vmatprep.subr.mxu0 0.0
  %153 = vmatpush2.msra.mxu0 0.0
  %154 = vmatprep.subr.mxu0 0.0
  %155 = vmatpush2.msra.mxu0 0.0
  %156 = vmatprep.subr.mxu0 0.0
  %157 = vmatpush2.msra.mxu0 0.0
  %158 = vmatprep.subr.mxu0 0.0
  %159 = vmatpush2.msra.mxu0 0.0
  %160 = vmatprep.subr.mxu0 0.0
  %161 = vmatpush2.msra.mxu0 0.0
  %162 = vmatprep.subr.mxu0 0.0
  %163 = vmatpush2.msra.mxu0 0.0
  %164 = vmatprep.subr.mxu0 0.0
  %165 = vmatpush2.msra.mxu0 0.0
  %166 = vmatprep.subr.mxu0 0.0
  %167 = vmatpush2.msra.mxu0 0.0
  %168 = vmatprep.subr.mxu0 0.0
  %169 = vmatpush2.msra.mxu0 0.0
  %170 = vmatprep.subr.mxu0 0.0
  %171 = vmatpush2.msra.mxu0 0.0
  %172 = vmatprep.subr.mxu0 0.0
  %173 = vmatpush2.msra.mxu0 0.0
  %174 = vmatprep.subr.mxu0 0.0
  %175 = vmatpush2.msra.mxu0 0.0
  %176 = vmatprep.subr.mxu0 0.0
  %177 = vmatpush2.msra.mxu0 0.0
  %178 = vmatprep.subr.mxu0 0.0
  %179 = vmatpush2.msra.mxu0 0.0
  %180 = vmatprep.subr.mxu0 0.0
  %181 = vmatpush2.msra.mxu0 0.0
  %182 = vmatprep.mubr.f32.mxu0 0.0
  %183 = vmatmul.mubr.f32.gmra.mxu0 %v97
  %v184 = vpop.f32.mrf.mxu0
  %v185 = vadd.f32 %v117, %v184
  %v186 = vpop.f32.mrf.mxu0
  %187 = vdwg.mxu0
  %vm188 = vcmask 31744
  %189 = vst.msk [vmem:[%s3] sm:$0xff] %vm188, %v185
  // Predicated region
  $region14: #{tpu_custom_call.1} parent=0 // pred_check
    _
  $region15: #{tpu_custom_call.1} parent=0 // pred_check_branch
    %191 = sbr.rel (0) target = $region17
  $region16: #{tpu_custom_call.1} parent=0 // pred_region
    _
  $region17: #{tpu_custom_call.1} parent=0 // pred_fallthru
    _
  // Predicated region
  $region18: #{tpu_custom_call.1} parent=0 // pred_check
    _
  $region19: #{tpu_custom_call.1} parent=0 // pred_check_branch
    %193 = sbr.rel (0) target = $region21
  $region20: #{tpu_custom_call.1} parent=0 // pred_region
    _
  $region21: #{tpu_custom_call.1} parent=0 // pred_fallthru
    _

</llo_original>
